<compile_context>
chip_gen: v7x
topology: tpu7x:2x2x1
jax: 0.10.0
libtpu: 0.0.40
codegen_flags: <defaults>
</compile_context>

<pallas_src>
import functools

import jax
import jax.numpy as jnp
import numpy as np
from jax.experimental import pallas as pl
from jax.experimental.pallas import tpu as pltpu

_LANE = 128


# ----------------------------------------------------------------------------
# Row-tile selection for the fused CE+OHEM kernel (native NCHW layout).
# ----------------------------------------------------------------------------
def _choose_row_tile(h, w, c, *, max_rows=512, vmem_budget_bytes=24 << 20):
    """Largest legal row tile (multiple of 8, or the full H) whose
    double-buffered logits+labels blocks fit the VMEM budget."""
    wp = pl.cdiv(w, _LANE) * _LANE                 # lane-padded width in VMEM
    bytes_per_row = 2 * (c + 1) * wp * 4           # 2 buffers, logits + labels
    budget_rows = max(int(vmem_budget_bytes // bytes_per_row), 8)
    th = min(h, max_rows, budget_rows)
    if th == h:
        return h                                   # full dim is always legal
    return max((th // 8) * 8, 8)


# ----------------------------------------------------------------------------
# Fused kernel: softmax cross-entropy + OHEM keep-mask + partial sum / count.
# ----------------------------------------------------------------------------
def _ohem_ce_kernel(thr_ref, logits_ref, labels_ref, psum_ref, pcnt_ref, *,
                    ignore_label, h, th):
    c = logits_ref.shape[1]
    labels = labels_ref[0]                                    # (TH, W) int32
    valid = labels != ignore_label
    if h % th != 0:                                           # ragged last block
        row_ids = jax.lax.broadcasted_iota(jnp.int32, labels.shape, 0)
        valid = valid & ((pl.program_id(1) * th + row_ids) < h)
    safe = jnp.where(valid, labels, 0)

    # Per-pixel running max over classes (pure VPU, classes on the outer axis).
    m = logits_ref[0, 0].astype(jnp.float32)
    for cc in range(1, c):
        m = jnp.maximum(m, logits_ref[0, cc].astype(jnp.float32))

    # Sum of exponentials + select-only pick of the ground-truth logit.
    s = jnp.zeros_like(m)
    gt_x = jnp.zeros_like(m)
    for cc in range(c):
        x = logits_ref[0, cc].astype(jnp.float32)
        s = s + jnp.exp(x - m)
        gt_x = jnp.where(safe == cc, x, gt_x)

    lse = m + jnp.log(s)
    loss = jnp.maximum(lse - gt_x, 0.0)          # -log_softmax[label] >= 0
    gt_prob = jnp.exp(-loss)                     # == softmax[label], <= 1

    thr = thr_ref[0, 0]
    kept = valid & (gt_prob <= thr)              # OOB/ignored pixels never kept
    block_sum = jnp.sum(jnp.where(kept, loss, 0.0))
    block_cnt = jnp.sum(jnp.where(kept, 1.0, 0.0))
    psum_ref[...] = block_sum.reshape(1, 1)
    pcnt_ref[...] = block_cnt.reshape(1, 1)


def ohem_ce_sum_count(predict, target, threshold, *, ignore_label,
                      max_rows=512):
    """Returns (sum of kept per-pixel CE losses, number of kept pixels)."""
    n, c, h, w = predict.shape
    th = _choose_row_tile(h, w, c, max_rows=max_rows)
    nb = pl.cdiv(h, th)
    labels = target.astype(jnp.int32)
    thr = jnp.asarray(threshold, jnp.float32).reshape(1, 1)

    kernel = functools.partial(_ohem_ce_kernel, ignore_label=ignore_label,
                               h=h, th=th)
    psum, pcnt = pl.pallas_call(
        kernel,
        out_shape=(jax.ShapeDtypeStruct((n, nb, 1, 1), jnp.float32),
                   jax.ShapeDtypeStruct((n, nb, 1, 1), jnp.float32)),
        grid=(n, nb),
        in_specs=[
            pl.BlockSpec(memory_space=pltpu.MemorySpace.SMEM),       # threshold
            pl.BlockSpec((1, c, th, w), lambda i, j: (i, 0, j, 0)),  # logits
            pl.BlockSpec((1, th, w), lambda i, j: (i, j, 0)),        # labels
        ],
        out_specs=(
            pl.BlockSpec((None, None, 1, 1), lambda i, j: (i, j, 0, 0)),
            pl.BlockSpec((None, None, 1, 1), lambda i, j: (i, j, 0, 0)),
        ),
        compiler_params=pltpu.CompilerParams(
            dimension_semantics=("parallel", "parallel"),
            vmem_limit_bytes=32 * 1024 * 1024),
    )(thr, predict, labels)
    return jnp.sum(psum), jnp.sum(pcnt)


# ----------------------------------------------------------------------------
# Tiny kernel: class-axis softmax for the zoom-touched pixels only.
# ----------------------------------------------------------------------------
def _class_softmax_kernel(x_ref, p_ref):
    c = x_ref.shape[1]
    m = x_ref[0, 0].astype(jnp.float32)
    for cc in range(1, c):
        m = jnp.maximum(m, x_ref[0, cc].astype(jnp.float32))
    es = []
    s = jnp.zeros_like(m)
    for cc in range(c):
        e = jnp.exp(x_ref[0, cc].astype(jnp.float32) - m)
        es.append(e)                             # reuse exps in the write loop
        s = s + e
    inv = 1.0 / s
    for cc in range(c):
        p_ref[0, cc] = es[cc] * inv


def _choose_cs_rows(rows, max_rows=256):
    if rows <= max_rows:
        return rows, rows
    rows_p = pl.cdiv(rows, max_rows) * max_rows
    return rows_p, max_rows


def class_softmax(logits_ncs, max_rows=256):
    """Softmax over the class (middle) axis of a small (N, C, S) array."""
    n, c, s = logits_ncs.shape
    rows = pl.cdiv(s, _LANE)
    rows_p, tr = _choose_cs_rows(rows, max_rows)
    sp = rows_p * _LANE
    x = logits_ncs
    if sp != s:
        x = jnp.pad(x, ((0, 0), (0, 0), (0, sp - s)))   # tiny (zoom taps only)
    x4 = x.reshape(n, c, rows_p, _LANE)
    probs = pl.pallas_call(
        _class_softmax_kernel,
        out_shape=jax.ShapeDtypeStruct((n, c, rows_p, _LANE), jnp.float32),
        grid=(n, rows_p // tr),
        in_specs=[pl.BlockSpec((1, c, tr, _LANE), lambda i, j: (i, 0, j, 0))],
        out_specs=pl.BlockSpec((1, c, tr, _LANE), lambda i, j: (i, 0, j, 0)),
        compiler_params=pltpu.CompilerParams(
            dimension_semantics=("parallel", "parallel")),
    )(x4)
    return probs.reshape(n, c, sp)[:, :, :s]


# ----------------------------------------------------------------------------
# Zoom helpers (static index/weight tables shared by kernel path & reference)
# ----------------------------------------------------------------------------
def _zoom_coords(in_size, out_size):
    # TODO(synk): scipy.ndimage.zoom's exact coordinate convention is
    # approximated by endpoint-aligned resampling (order=1 / order=0).
    scale = (in_size - 1) / (out_size - 1) if out_size > 1 else 0.0
    return np.arange(out_size, dtype=np.float64) * scale


def _zoom_linear_taps(in_size, out_size):
    coords = _zoom_coords(in_size, out_size)
    lo = np.minimum(np.floor(coords).astype(np.int32), in_size - 1)
    hi = np.minimum(lo + 1, in_size - 1)
    wgt = (coords - lo).astype(np.float32)
    return lo, hi, wgt


def _zoom_nearest_idx(in_size, out_size):
    coords = _zoom_coords(in_size, out_size)
    return np.clip(np.floor(coords + 0.5), 0, in_size - 1).astype(np.int32)


def _threshold_from_zoomed(zoom_prob, zoom_target, *, ignore_label, thresh,
                           min_kept_ds):
    c = zoom_prob.shape[1]
    labels = zoom_target.reshape(-1).astype(jnp.int32)
    valid = labels != ignore_label
    num_valid = jnp.sum(valid.astype(jnp.int32))

    probs_cp = jnp.moveaxis(zoom_prob, 1, 0).reshape(c, -1)
    safe = jnp.where(valid, labels, 0)
    pred = jnp.take_along_axis(probs_cp, safe[None, :], axis=0)[0]
    pred = jnp.where(valid, pred, jnp.inf)

    thr = jnp.float32(thresh)
    if min_kept_ds > 0:
        # k-th smallest via lax.top_k on the negated preds (no full sort).
        k_static = min(min_kept_ds, int(pred.shape[0]))
        neg_topk, _ = jax.lax.top_k(-pred, k_static)
        smallest = -neg_topk                                 # ascending order
        k_dyn = jnp.clip(jnp.minimum(num_valid, min_kept_ds) - 1, 0,
                         k_static - 1)
        new_threshold = smallest[k_dyn]
        thr = jnp.where(new_threshold > thresh, new_threshold, thr)
    return jnp.where(min_kept_ds >= num_valid, jnp.float32(1.0), thr)


def find_threshold(predict, target, *, ignore_label, thresh, min_kept, factor):
    """OHEM threshold from factor-downsampled probs: a single fused gather of
    the zoom-touched logits, a tiny Pallas class-softmax, bilinear combine."""
    n, c, h, w = predict.shape
    oh = max(int(round(h / factor)), 1)
    ow = max(int(round(w / factor)), 1)

    row_lo, row_hi, wh = _zoom_linear_taps(h, oh)
    col_lo, col_hi, ww = _zoom_linear_taps(w, ow)
    row_idx = np.stack([row_lo, row_hi], axis=1).reshape(-1)      # (2*oh,)
    col_idx = np.stack([col_lo, col_hi], axis=1).reshape(-1)      # (2*ow,)
    flat_idx = (row_idx[:, None].astype(np.int64) * w
                + col_idx[None, :].astype(np.int64)).reshape(-1)

    g = jnp.take(predict.reshape(n, c, h * w),
                 jnp.asarray(flat_idx, jnp.int32), axis=2)        # one gather
    q = class_softmax(g).reshape(n, c, oh, 2, ow, 2)

    whj = jnp.asarray(wh).reshape(1, 1, oh, 1)
    wwj = jnp.asarray(ww).reshape(1, 1, 1, ow)
    zoom_prob = ((1.0 - whj) * (1.0 - wwj) * q[:, :, :, 0, :, 0]
                 + (1.0 - whj) * wwj * q[:, :, :, 0, :, 1]
                 + whj * (1.0 - wwj) * q[:, :, :, 1, :, 0]
                 + whj * wwj * q[:, :, :, 1, :, 1])               # (n,c,oh,ow)

    ridx = _zoom_nearest_idx(h, oh)
    cidx = _zoom_nearest_idx(w, ow)
    tflat = (ridx[:, None].astype(np.int64) * w
             + cidx[None, :].astype(np.int64)).reshape(-1)
    zoom_tgt = jnp.take(target.reshape(n, h * w),
                        jnp.asarray(tflat, jnp.int32), axis=1).reshape(n, oh, ow)

    return _threshold_from_zoomed(zoom_prob, zoom_tgt, ignore_label=ignore_label,
                                  thresh=thresh,
                                  min_kept_ds=min_kept // (factor * factor))


# ----------------------------------------------------------------------------
# Full forward (== OhemCrossEntropy2d.forward)
# ----------------------------------------------------------------------------
def ohem_cross_entropy_2d(predict, target, *, ignore_label=255, thresh=0.7,
                          min_kept=100000, factor=8, max_rows=512):
    # 1) threshold from the downsampled probs (depends only on inputs).
    threshold = find_threshold(predict, target, ignore_label=ignore_label,
                               thresh=thresh, min_kept=min_kept, factor=factor)
    # 2) single fused pass over predict: CE + OHEM mask + sum / count.
    loss_sum, kept_cnt = ohem_ce_sum_count(predict, target, threshold,
                                           ignore_label=ignore_label,
                                           max_rows=max_rows)
    # TODO(synk): NaN when no pixel is kept (all-ignored target), matching
    # nn.CrossEntropyLoss(ignore_index=...) on an all-ignored target.
    return loss_sum / kept_cnt


# ----------------------------------------------------------------------------
# Pure-JAX reference (validates the Pallas kernels)
# ----------------------------------------------------------------------------
def _linear_resize_axis(x, out_size, axis):
    lo, hi, wgt = _zoom_linear_taps(x.shape[axis], out_size)
    xlo = jnp.take(x, jnp.asarray(lo), axis=axis)
    xhi = jnp.take(x, jnp.asarray(hi), axis=axis)
    shape = [1] * x.ndim
    shape[axis] = out_size
    wgt = jnp.asarray(wgt).reshape(shape)
    return xlo * (1.0 - wgt) + xhi * wgt


def _nearest_resize_axis(x, out_size, axis):
    idx = jnp.asarray(_zoom_nearest_idx(x.shape[axis], out_size))
    return jnp.take(x, idx, axis=axis)


def reference_ohem(predict, target, *, ignore_label=255, thresh=0.7,
                   min_kept=100000, factor=8):
    n, c, h, w = predict.shape
    oh = max(int(round(h / factor)), 1)
    ow = max(int(round(w / factor)), 1)

    prob = jax.nn.softmax(predict, axis=1)
    p = _linear_resize_axis(prob, oh, 2)
    p = _linear_resize_axis(p, ow, 3)
    t = _nearest_resize_axis(target, oh, 1)
    t = _nearest_resize_axis(t, ow, 2)
    threshold = _threshold_from_zoomed(p, t, ignore_label=ignore_label,
                                       thresh=thresh,
                                       min_kept_ds=min_kept // (factor * factor))

    labels = target.reshape(-1).astype(jnp.int32)
    valid = labels != ignore_label
    safe = jnp.where(valid, labels, 0)
    logp = jax.nn.log_softmax(predict, axis=1)
    prob_cp = jnp.moveaxis(prob, 1, 0).reshape(c, -1)
    logp_cp = jnp.moveaxis(logp, 1, 0).reshape(c, -1)
    pred = jnp.take_along_axis(prob_cp, safe[None, :], axis=0)[0]
    nll = -jnp.take_along_axis(logp_cp, safe[None, :], axis=0)[0]
    kept = valid & (pred <= threshold)
    keptf = kept.astype(jnp.float32)
    return jnp.sum(nll * keptf) / jnp.sum(keptf)


if __name__ == "__main__":
    key = jax.random.PRNGKey(0)
    n, c, h, w = 2, 4, 16, 16
    k1, k2, k3 = jax.random.split(key, 3)

    predict = jax.random.normal(k1, (n, c, h, w), jnp.float32) * 3.0
    target = jax.random.randint(k2, (n, h, w), 0, c).astype(jnp.int32)
    ignore_mask = jax.random.uniform(k3, (n, h, w)) < 0.2
    target = jnp.where(ignore_mask, 255, target)

    # 1) Default module params (min_kept dominates -> threshold = 1.0 path).
    loss = jax.block_until_ready(ohem_cross_entropy_2d(predict, target))
    ref = jax.block_until_ready(reference_ohem(predict, target))
    np.testing.assert_allclose(float(loss), float(ref), rtol=1e-5, atol=1e-5)

    # 2) Small min_kept / factor to exercise the hard-example threshold path.
    loss2 = jax.block_until_ready(
        ohem_cross_entropy_2d(predict, target, min_kept=128, factor=2))
    ref2 = jax.block_until_ready(
        reference_ohem(predict, target, min_kept=128, factor=2))
    np.testing.assert_allclose(float(loss2), float(ref2), rtol=1e-5, atol=1e-5)

    # 3) Non-128-aligned width (ragged lanes, handled without any pad copy).
    predict3 = predict[:, :, :, :15]
    target3 = target[:, :, :15]
    loss3 = jax.block_until_ready(
        ohem_cross_entropy_2d(predict3, target3, min_kept=64, factor=2))
    ref3 = jax.block_until_ready(
        reference_ohem(predict3, target3, min_kept=64, factor=2))
    np.testing.assert_allclose(float(loss3), float(ref3), rtol=1e-5, atol=1e-5)

    # 4) Ragged height + forced small row tile -> partial row-block masking.
    predict4 = predict[:, :, :13, :15]
    target4 = target[:, :13, :15]
    loss4 = jax.block_until_ready(
        ohem_cross_entropy_2d(predict4, target4, max_rows=8))
    ref4 = jax.block_until_ready(reference_ohem(predict4, target4))
    np.testing.assert_allclose(float(loss4), float(ref4), rtol=1e-5, atol=1e-5)

    assert all(np.isfinite(float(x)) for x in (loss, loss2, loss3, loss4))
    print("KERNEL_OK")
</pallas_src>

<mosaic_0001>
module attributes {stable_mosaic.version = 11 : i64} {
  func.func @_class_softmax_kernel(%arg0: i32, %arg1: i32, %arg2: memref<1x4x1x128xf32, #tpu.memory_space<vmem>>, %arg3: memref<1x4x1x128xf32, #tpu.memory_space<vmem>>) attributes {dimension_semantics = [#tpu.dimension_semantics<parallel>, #tpu.dimension_semantics<parallel>], iteration_bounds = array<i64: 2, 1>, scalar_prefetch = 0 : i64, scratch_operands = 0 : i64, tpu.core_type = #tpu.core_type<tc>, window_params = [{transform_indices = @transform_0, window_bounds = array<i64: 1, 4, 1, 128>}, {transform_indices = @transform_1, window_bounds = array<i64: 1, 4, 1, 128>}]} {
    %c0 = arith.constant 0 : index
    %c0_0 = arith.constant 0 : index
    %c0_1 = arith.constant 0 : index
    %c0_2 = arith.constant 0 : index
    %0 = vector.load %arg2[%c0, %c0_0, %c0_1, %c0_2] : memref<1x4x1x128xf32, #tpu.memory_space<vmem>>, vector<1x1x1x128xf32>
    %1 = vector.shape_cast %0 : vector<1x1x1x128xf32> to vector<1x128xf32>
    %c0_3 = arith.constant 0 : index
    %c1 = arith.constant 1 : index
    %c0_4 = arith.constant 0 : index
    %c0_5 = arith.constant 0 : index
    %2 = vector.load %arg2[%c0_3, %c1, %c0_4, %c0_5] : memref<1x4x1x128xf32, #tpu.memory_space<vmem>>, vector<1x1x1x128xf32>
    %3 = vector.shape_cast %2 : vector<1x1x1x128xf32> to vector<1x128xf32>
    %4 = arith.maximumf %1, %3 : vector<1x128xf32>
    %c0_6 = arith.constant 0 : index
    %c2 = arith.constant 2 : index
    %c0_7 = arith.constant 0 : index
    %c0_8 = arith.constant 0 : index
    %5 = vector.load %arg2[%c0_6, %c2, %c0_7, %c0_8] : memref<1x4x1x128xf32, #tpu.memory_space<vmem>>, vector<1x1x1x128xf32>
    %6 = vector.shape_cast %5 : vector<1x1x1x128xf32> to vector<1x128xf32>
    %7 = arith.maximumf %4, %6 : vector<1x128xf32>
    %c0_9 = arith.constant 0 : index
    %c3 = arith.constant 3 : index
    %c0_10 = arith.constant 0 : index
    %c0_11 = arith.constant 0 : index
    %8 = vector.load %arg2[%c0_9, %c3, %c0_10, %c0_11] : memref<1x4x1x128xf32, #tpu.memory_space<vmem>>, vector<1x1x1x128xf32>
    %9 = vector.shape_cast %8 : vector<1x1x1x128xf32> to vector<1x128xf32>
    %10 = arith.maximumf %7, %9 : vector<1x128xf32>
    %cst = arith.constant 0.000000e+00 : f32
    %11 = vector.broadcast %cst : f32 to vector<1x128xf32>
    %c0_12 = arith.constant 0 : index
    %c0_13 = arith.constant 0 : index
    %c0_14 = arith.constant 0 : index
    %c0_15 = arith.constant 0 : index
    %12 = vector.load %arg2[%c0_12, %c0_13, %c0_14, %c0_15] : memref<1x4x1x128xf32, #tpu.memory_space<vmem>>, vector<1x1x1x128xf32>
    %13 = vector.shape_cast %12 : vector<1x1x1x128xf32> to vector<1x128xf32>
    %14 = arith.subf %13, %10 : vector<1x128xf32>
    %15 = math.exp %14 : vector<1x128xf32>
    %16 = arith.addf %11, %15 : vector<1x128xf32>
    %c0_16 = arith.constant 0 : index
    %c1_17 = arith.constant 1 : index
    %c0_18 = arith.constant 0 : index
    %c0_19 = arith.constant 0 : index
    %17 = vector.load %arg2[%c0_16, %c1_17, %c0_18, %c0_19] : memref<1x4x1x128xf32, #tpu.memory_space<vmem>>, vector<1x1x1x128xf32>
    %18 = vector.shape_cast %17 : vector<1x1x1x128xf32> to vector<1x128xf32>
    %19 = arith.subf %18, %10 : vector<1x128xf32>
    %20 = math.exp %19 : vector<1x128xf32>
    %21 = arith.addf %16, %20 : vector<1x128xf32>
    %c0_20 = arith.constant 0 : index
    %c2_21 = arith.constant 2 : index
    %c0_22 = arith.constant 0 : index
    %c0_23 = arith.constant 0 : index
    %22 = vector.load %arg2[%c0_20, %c2_21, %c0_22, %c0_23] : memref<1x4x1x128xf32, #tpu.memory_space<vmem>>, vector<1x1x1x128xf32>
    %23 = vector.shape_cast %22 : vector<1x1x1x128xf32> to vector<1x128xf32>
    %24 = arith.subf %23, %10 : vector<1x128xf32>
    %25 = math.exp %24 : vector<1x128xf32>
    %26 = arith.addf %21, %25 : vector<1x128xf32>
    %c0_24 = arith.constant 0 : index
    %c3_25 = arith.constant 3 : index
    %c0_26 = arith.constant 0 : index
    %c0_27 = arith.constant 0 : index
    %27 = vector.load %arg2[%c0_24, %c3_25, %c0_26, %c0_27] : memref<1x4x1x128xf32, #tpu.memory_space<vmem>>, vector<1x1x1x128xf32>
    %28 = vector.shape_cast %27 : vector<1x1x1x128xf32> to vector<1x128xf32>
    %29 = arith.subf %28, %10 : vector<1x128xf32>
    %30 = math.exp %29 : vector<1x128xf32>
    %31 = arith.addf %26, %30 : vector<1x128xf32>
    %cst_28 = arith.constant 1.000000e+00 : f32
    %32 = vector.broadcast %cst_28 : f32 to vector<1x128xf32>
    %33 = arith.divf %32, %31 : vector<1x128xf32>
    %34 = arith.mulf %15, %33 : vector<1x128xf32>
    %c0_29 = arith.constant 0 : index
    %c0_30 = arith.constant 0 : index
    %c0_31 = arith.constant 0 : index
    %c0_32 = arith.constant 0 : index
    %35 = vector.load %arg3[%c0_29, %c0_30, %c0_31, %c0_32] : memref<1x4x1x128xf32, #tpu.memory_space<vmem>>, vector<1x1x1x128xf32>
    %36 = vector.shape_cast %35 : vector<1x1x1x128xf32> to vector<1x128xf32>
    %37 = vector.shape_cast %34 : vector<1x128xf32> to vector<1x1x1x128xf32>
    tpu.vector_store %arg3[%c0_29, %c0_30, %c0_31, %c0_32], %37 {strides = array<i32>} : memref<1x4x1x128xf32, #tpu.memory_space<vmem>>, vector<1x1x1x128xf32>,
    %38 = arith.mulf %20, %33 : vector<1x128xf32>
    %c0_33 = arith.constant 0 : index
    %c1_34 = arith.constant 1 : index
    %c0_35 = arith.constant 0 : index
    %c0_36 = arith.constant 0 : index
    %39 = vector.load %arg3[%c0_33, %c1_34, %c0_35, %c0_36] : memref<1x4x1x128xf32, #tpu.memory_space<vmem>>, vector<1x1x1x128xf32>
    %40 = vector.shape_cast %39 : vector<1x1x1x128xf32> to vector<1x128xf32>
    %41 = vector.shape_cast %38 : vector<1x128xf32> to vector<1x1x1x128xf32>
    tpu.vector_store %arg3[%c0_33, %c1_34, %c0_35, %c0_36], %41 {strides = array<i32>} : memref<1x4x1x128xf32, #tpu.memory_space<vmem>>, vector<1x1x1x128xf32>,
    %42 = arith.mulf %25, %33 : vector<1x128xf32>
    %c0_37 = arith.constant 0 : index
    %c2_38 = arith.constant 2 : index
    %c0_39 = arith.constant 0 : index
    %c0_40 = arith.constant 0 : index
    %43 = vector.load %arg3[%c0_37, %c2_38, %c0_39, %c0_40] : memref<1x4x1x128xf32, #tpu.memory_space<vmem>>, vector<1x1x1x128xf32>
    %44 = vector.shape_cast %43 : vector<1x1x1x128xf32> to vector<1x128xf32>
    %45 = vector.shape_cast %42 : vector<1x128xf32> to vector<1x1x1x128xf32>
    tpu.vector_store %arg3[%c0_37, %c2_38, %c0_39, %c0_40], %45 {strides = array<i32>} : memref<1x4x1x128xf32, #tpu.memory_space<vmem>>, vector<1x1x1x128xf32>,
    %46 = arith.mulf %30, %33 : vector<1x128xf32>
    %c0_41 = arith.constant 0 : index
    %c3_42 = arith.constant 3 : index
    %c0_43 = arith.constant 0 : index
    %c0_44 = arith.constant 0 : index
    %47 = vector.load %arg3[%c0_41, %c3_42, %c0_43, %c0_44] : memref<1x4x1x128xf32, #tpu.memory_space<vmem>>, vector<1x1x1x128xf32>
    %48 = vector.shape_cast %47 : vector<1x1x1x128xf32> to vector<1x128xf32>
    %49 = vector.shape_cast %46 : vector<1x128xf32> to vector<1x1x1x128xf32>
    tpu.vector_store %arg3[%c0_41, %c3_42, %c0_43, %c0_44], %49 {strides = array<i32>} : memref<1x4x1x128xf32, #tpu.memory_space<vmem>>, vector<1x1x1x128xf32>,
    return
  }
  func.func @transform_0(%arg0: i32, %arg1: i32) -> (i32, i32, i32, i32) {
    %c0_i32 = arith.constant 0 : i32
    %c0_i32_0 = arith.constant 0 : i32
    %c0_i32_1 = arith.constant 0 : i32
    return %arg0, %c0_i32, %arg1, %c0_i32_0 : i32, i32, i32, i32
  }
  func.func @transform_1(%arg0: i32, %arg1: i32) -> (i32, i32, i32, i32) {
    %c0_i32 = arith.constant 0 : i32
    %c0_i32_0 = arith.constant 0 : i32
    %c0_i32_1 = arith.constant 0 : i32
    return %arg0, %c0_i32, %arg1, %c0_i32_0 : i32, i32, i32, i32
  }
}

</mosaic_0001>

<llo_original>
// kernel: tpu_custom_call.1
$region0: #{tpu_custom_call.1}
  #allocation0 [shape = 'u32[]', space=smem, size = 0x4, offset = 0x4, fixed_abs, tag = 'smem constant byte address 0x4 - core index']
  #allocation1 [shape = 'u32[144,128]{1,0:T(1,128)}', space=vmem, size = 0x12000, scoped, tag = 'internal scratch']
  %s0 = inlined_call_operand.hbm [shape: f32[2,4,1,128], index: 0, kind: input, shape index: {}]
  %s1 = inlined_call_operand.hbm [shape: f32[2,4,1,128], index: 1, kind: output, shape index: {}]
  %s2 = sld [smem:[#allocation0]]
  $region41: #{tpu_custom_call.1} parent=0
    _
  %s4 = ssub.s32 1, %s2
  %s5 = scalar_select 0, %s4, %s2
  $region1: #{tpu_custom_call.1} parent=0
    #allocation2 [shape = 'u8[4096]{0}', space=vmem, size = 0x1000, scoped, tag = 'input window, operand 0']
    #allocation3 [shape = 's32[2]{0}', space=sflag, size = 0x8, scoped, tag = 'scoped memory for tpu_custom_call.1']
    #allocation4 [shape = 's32[2]{0}', space=sflag, size = 0x8, scoped, tag = 'scoped memory for tpu_custom_call.1']
    #allocation5 [shape = 'u8[4096]{0}', space=vmem, size = 0x1000, scoped, tag = 'output window, operand 0']
    %6 = vsyncpa [#allocation3], 0
    %s7 = scalar_lea.sflag [#allocation3], 1
    %8 = vsyncpa %s7, 0
    %9 = vsyncpa [#allocation4], 0
    %s10 = scalar_lea.sflag [#allocation4], 1
    %11 = vsyncpa %s10, 0
    loop: start=0, step=1, limit=4
    $region2: #{tpu_custom_call.1} parent=1 // loop_pre_header
      _
    $region3: #{tpu_custom_call.1} parent=1 // loop_header
      %s13 = sphi 0, %s17
      %p14 = scmp.ge.s32.totalorder %s13, 4
      %s20 = sphi 0, %s32
      %s21 = sphi 0, %s28
      %s22 = sphi 0, %s20
      %s23 = sphi 0, %s21
      %s24 = sphi 0, %s22
      %s25 = sphi 0, %s23
      %s37 = sphi 0, %s39
      %s40 = sphi 0, %s37
      %s41 = sphi 0, %s40
      %s57 = sphi 0, %s41
      %s65 = sphi 0, %s67
      %s68 = sphi 0, %s65
      %s69 = sphi 0, %s68
      %s85 = sphi 0, %s69
    $region4: #{tpu_custom_call.1} parent=1 // loop_header_branch
      %16 = sbr.rel (%p14) target = $region8
    $region5: #{tpu_custom_call.1} parent=1 // loop_body
      %s18 = ssub.s32 %s13, 1
      %s19 = ssub.s32 %s13, 2
      %s26 = sadd.s32 1, %s21
      %p27 = scmp.ge.s32.totalorder %s26, 1
      %s28 = scalar_select %p27, 0, %s26
      %s29 = sadd.s32 1, %s20
      %s30 = scalar_select %p27, %s29, %s20
      %p31 = scmp.ge.s32.totalorder %s30, 2
      %s32 = scalar_select %p31, 0, %s30
      %s33 = ssub.s32 %s20, %s32
      %s34 = ssub.s32 %s21, %s28
      %s35 = sor.u32 %s33, %s34
      %p36 = scmp.eq.s32.totalorder %s35, 0
      %s38 = sadd.s32 %s37, 1
      %s39 = scalar_select %p36, %s37, %s38
      %p42 = pneg %p36
      %p43 = scmp.eq.s32.totalorder %s13, 1
      %p44 = por %p42, %p43
      %p45 = scmp.ne.s32.totalorder %s37, %s40
      %p46 = scmp.eq.s32.totalorder %s13, 0
      %p47 = por %p45, %p46
      %p48 = scmp.ne.s32.totalorder %s37, %s40
      %p49 = scmp.eq.s32.totalorder %s18, 1
      %p50 = por %p48, %p49
      %p51 = scmp.ne.s32.totalorder %s40, %s41
      %p52 = scmp.eq.s32.totalorder %s18, 0
      %p53 = por %p51, %p52
      %p54 = scmp.ne.s32.totalorder %s40, %s41
      %p55 = scmp.eq.s32.totalorder %s19, 1
      %p56 = por %p54, %p55
      %p58 = scmp.ne.s32.totalorder %s41, %s57
      %p59 = scmp.eq.s32.totalorder %s19, 0
      %p60 = por %p58, %p59
      %s61 = ssub.s32 %s20, %s32
      %s62 = ssub.s32 %s21, %s28
      %s63 = sor.u32 %s61, %s62
      %p64 = scmp.eq.s32.totalorder %s63, 0
      %s66 = sadd.s32 %s65, 1
      %s67 = scalar_select %p64, %s65, %s66
      %p70 = pneg %p64
      %p71 = scmp.eq.s32.totalorder %s13, 1
      %p72 = por %p70, %p71
      %p73 = scmp.ne.s32.totalorder %s65, %s68
      %p74 = scmp.eq.s32.totalorder %s13, 0
      %p75 = por %p73, %p74
      %p76 = scmp.ne.s32.totalorder %s65, %s68
      %p77 = scmp.eq.s32.totalorder %s18, 1
      %p78 = por %p76, %p77
      %p79 = scmp.ne.s32.totalorder %s68, %s69
      %p80 = scmp.eq.s32.totalorder %s18, 0
      %p81 = por %p79, %p80
      %p82 = scmp.ne.s32.totalorder %s68, %s69
      %p83 = scmp.eq.s32.totalorder %s19, 1
      %p84 = por %p82, %p83
      %p86 = scmp.ne.s32.totalorder %s69, %s85
      %p87 = scmp.eq.s32.totalorder %s19, 0
      %p88 = por %p86, %p87
      %p89 = scmp.le.s32.totalorder 1, %s13
      %p90 = scmp.lt.s32.totalorder %s13, 3
      %p91 = pnand %p89, %p90
      %p92 = pneg %p91
      // Predicated region
      $region9: #{tpu_custom_call.1} parent=5 // pred_check
        _
      $region10: #{tpu_custom_call.1} parent=5 // pred_check_branch
        %94 = sbr.rel (%p91) target = $region12
      $region11: #{tpu_custom_call.1} parent=5 // pred_region
        %s95 = ssub.s32 %s13, 1
      $region12: #{tpu_custom_call.1} parent=5 // pred_fallthru
        _
      %p96 = scmp.lt.s32.totalorder %s13, 2
      // Predicated region
      $region13: #{tpu_custom_call.1} parent=5 // pred_check
        %p97 = pneg %p96
      $region14: #{tpu_custom_call.1} parent=5 // pred_check_branch
        %99 = sbr.rel (%p97) target = $region16
      $region15: #{tpu_custom_call.1} parent=5 // pred_region
        // Predicated region
        $region17: #{tpu_custom_call.1} parent=15 // pred_check
          %p100 = pneg %p47
        $region18: #{tpu_custom_call.1} parent=15 // pred_check_branch
          %102 = sbr.rel (%p100) target = $region20
        $region19: #{tpu_custom_call.1} parent=15 // pred_region
          %s103 = sand.u32 %s37, 1
          %s104 = scalar_lea.sflag [#allocation3], %s103
          %s105 = sand.u32 %s37, 1
          %s106 = smul.addr %s105, 4
          %s107 = scalar_lea.vmem [#allocation2], %s106
          %s109 = ssub.s32 64, 64
          %110 = vsyncadd %s104, %s109
          %s111 = smul.addr %s20, 4
          %s112 = sadd.s32 %s21, %s111
          %s113 = smul.addr %s112, 16
          %s114 = scalar_lea.hbm %s0, %s113
          %s115 = sshll.u32 %s107, 4
          %s116 = int_to_ptr.vmem [resolvable:$true] %s115
          %121 = dma.hbm_to_vmem [thread:$0]  %s114, 64, %s116, %s104, 16, 16, 1
        $region20: #{tpu_custom_call.1} parent=15 // pred_fallthru
          _
      $region16: #{tpu_custom_call.1} parent=5 // pred_fallthru
        _
      %p122 = scmp.le.s32.totalorder 1, %s13
      %p123 = scmp.lt.s32.totalorder %s13, 3
      %p124 = pnand %p122, %p123
      %p125 = pneg %p124
      // Predicated region
      $region21: #{tpu_custom_call.1} parent=5 // pred_check
        _
      $region22: #{tpu_custom_call.1} parent=5 // pred_check_branch
        %127 = sbr.rel (%p124) target = $region24
      $region23: #{tpu_custom_call.1} parent=5 // pred_region
        %s128 = ssub.s32 %s13, 1
        %s129 = sand.u32 %s40, 1
        %s130 = scalar_lea.sflag [#allocation3], %s129
        %s131 = sand.u32 %s40, 1
        %s132 = smul.addr %s131, 4
        %s133 = scalar_lea.vmem [#allocation2], %s132
        // Predicated region
        $region25: #{tpu_custom_call.1} parent=23 // pred_check
          %p134 = pneg %p53
        $region26: #{tpu_custom_call.1} parent=23 // pred_check_branch
          %136 = sbr.rel (%p134) target = $region28
        $region27: #{tpu_custom_call.1} parent=23 // pred_region
          %137 = dma.done %s130, 64
        $region28: #{tpu_custom_call.1} parent=23 // pred_fallthru
          _
        %s138 = sand.u32 %s40, 1
        %s139 = scalar_lea.sflag [#allocation3], %s138
        %s140 = sand.u32 %s40, 1
        %s141 = smul.addr %s140, 4
        %s142 = scalar_lea.vmem [#allocation2], %s141
        %p143 = pneg %p53
        %p144 = pneg %p50
        %p145 = pneg %p81
        %p146 = pneg %p78
        %s147 = sand.u32 %s68, 1
        %s148 = scalar_lea.sflag [#allocation4], %s147
        %s149 = sand.u32 %s68, 1
        %s150 = smul.addr %s149, 4
        %s151 = scalar_lea.vmem [#allocation5], %s150
        %v152 = vld [vmem:[%s133] sm:$0x1]
        %s153 = scalar_lea.vmem %s133, 1 [#allocation2]
        %v154 = vld [vmem:[%s153] sm:$0x1]
        %v155 = vmax.f32 %v152, %v154
        %s156 = scalar_lea.vmem %s133, 2 [#allocation2]
        %v157 = vld [vmem:[%s156] sm:$0x1]
        %v158 = vmax.f32 %v155, %v157
        %s159 = scalar_lea.vmem %s133, 3 [#allocation2]
        %v160 = vld [vmem:[%s159] sm:$0x1]
        %v161 = vmax.f32 %v158, %v160
        %v162 = vsub.f32 %v152, %v161
        %v163 = vmul.f32 %v162, 1.442695
        %v164 = vpow.pop %v163
        %v165 = vadd.f32 %v164, 0.0
        %v166 = vsub.f32 %v154, %v161
        %v167 = vmul.f32 %v166, 1.442695
        %v168 = vpow.pop %v167
        %v169 = vadd.f32 %v165, %v168
        %v170 = vsub.f32 %v157, %v161
        %v171 = vmul.f32 %v170, 1.442695
        %v172 = vpow.pop %v171
        %v173 = vadd.f32 %v169, %v172
        %v174 = vsub.f32 %v160, %v161
        %v175 = vmul.f32 %v174, 1.442695
        %v176 = vpow.pop %v175
        %v177 = vadd.f32 %v173, %v176
        %v178 = vrcp.pop %v177
        %v179 = vmul.f32 1.0, %v178
        %v180 = vmul.f32 %v164, %v179
        %181 = vst [vmem:[%s151] sm:$0x1] %v180
        %v182 = vmul.f32 %v168, %v179
        %s183 = scalar_lea.vmem %s151, 1 [#allocation5]
        %184 = vst [vmem:[%s183] sm:$0x1] %v182
        %v185 = vmul.f32 %v172, %v179
        %s186 = scalar_lea.vmem %s151, 2 [#allocation5]
        %187 = vst [vmem:[%s186] sm:$0x1] %v185
        %v188 = vmul.f32 %v176, %v179
        %s189 = scalar_lea.vmem %s151, 3 [#allocation5]
        %190 = vst [vmem:[%s189] sm:$0x1] %v188
        %s191 = sand.u32 %s68, 1
        %s192 = scalar_lea.sflag [#allocation4], %s191
        %s193 = sand.u32 %s68, 1
        %s194 = smul.addr %s193, 4
        %s195 = scalar_lea.vmem [#allocation5], %s194
        // Predicated region
        $region29: #{tpu_custom_call.1} parent=23 // pred_check
          %p196 = pneg %p78
        $region30: #{tpu_custom_call.1} parent=23 // pred_check_branch
          %198 = sbr.rel (%p196) target = $region32
        $region31: #{tpu_custom_call.1} parent=23 // pred_region
          %s200 = ssub.s32 64, 64
          %201 = vsyncadd %s192, %s200
          %s202 = smul.addr %s22, 4
          %s203 = sadd.s32 %s23, %s202
          %s204 = smul.addr %s203, 16
          %s205 = scalar_lea.hbm %s1, %s204
          %s206 = sshll.u32 %s195, 4
          %s207 = int_to_ptr.vmem [resolvable:$true] %s206
          %212 = dma.vmem_to_hbm [thread:$0]  %s207, 64, %s205, %s192, 16, 16, 1
        $region32: #{tpu_custom_call.1} parent=23 // pred_fallthru
          _
      $region24: #{tpu_custom_call.1} parent=5 // pred_fallthru
        _
      %p213 = scmp.le.s32.totalorder 2, %s13
      // Predicated region
      $region33: #{tpu_custom_call.1} parent=5 // pred_check
        %p214 = pneg %p213
      $region34: #{tpu_custom_call.1} parent=5 // pred_check_branch
        %216 = sbr.rel (%p214) target = $region36
      $region35: #{tpu_custom_call.1} parent=5 // pred_region
        %s217 = ssub.s32 %s13, 2
        // Predicated region
        $region37: #{tpu_custom_call.1} parent=35 // pred_check
          %p218 = pneg %p84
        $region38: #{tpu_custom_call.1} parent=35 // pred_check_branch
          %220 = sbr.rel (%p218) target = $region40
        $region39: #{tpu_custom_call.1} parent=35 // pred_region
          %s221 = sand.u32 %s69, 1
          %s222 = scalar_lea.sflag [#allocation4], %s221
          %s223 = sand.u32 %s69, 1
          %s224 = smul.addr %s223, 4
          %s225 = scalar_lea.vmem [#allocation5], %s224
          %226 = dma.done %s222, 64
        $region40: #{tpu_custom_call.1} parent=35 // pred_fallthru
          _
      $region36: #{tpu_custom_call.1} parent=5 // pred_fallthru
        _
    $region6: #{tpu_custom_call.1} parent=1 // loop_footer
      %s17 = sadd.s32 1, %s13
    $region7: #{tpu_custom_call.1} parent=1 // loop_footer_branch
      %12 = sbr.rel target = $region3
    $region8: #{tpu_custom_call.1} parent=1 // loop_exit
      _
    %227 = vsyncpa [#allocation3], 1
    %s228 = scalar_lea.sflag [#allocation3], 1
    %229 = vsyncpa %s228, 1
    %230 = vsyncpa [#allocation4], 1
    %s231 = scalar_lea.sflag [#allocation4], 1
    %232 = vsyncpa %s231, 1

</llo_original>
